<compile_context>
chip_gen: v6e
topology: v6e:2x2x1
jax: 0.10.0
libtpu: 0.0.40
codegen_flags: <defaults>
</compile_context>

<pallas_src>
import jax
import jax.numpy as jnp
from jax.experimental import pallas as pl
from jax.experimental.pallas import tpu as pltpu

HIDDEN = 256


def _round_up(x, m):
    return (x + m - 1) // m * m


# ---------------------------------------------------------------------------
# Kernel
# ---------------------------------------------------------------------------
def _policy_encoder_kernel(x_ref,
                           w1_ref, b1_ref,
                           w2_ref, b2_ref,
                           w3_ref, b3_ref,
                           w4_ref, b4_ref,
                           o_ref):
    # Layer 1: (TB, S) @ (S, 256), kept in f32 (K=32 is ~5% of FLOPs; reading
    # x as f32 avoids a wrapper-side bf16 HBM copy and improves precision).
    h = jnp.dot(x_ref[...], w1_ref[...], preferred_element_type=jnp.float32)
    h = jnp.maximum(h + b1_ref[...], 0.0)          # bias + ReLU in f32 (VPU)

    # Layer 2: (TB, 256) @ (256, 256), bf16 MXU inputs, f32 accumulation.
    h = jnp.dot(h.astype(w2_ref.dtype), w2_ref[...],
                preferred_element_type=jnp.float32)
    h = jnp.maximum(h + b2_ref[...], 0.0)

    # Layer 3: (TB, 256) @ (256, 256)
    h = jnp.dot(h.astype(w3_ref.dtype), w3_ref[...],
                preferred_element_type=jnp.float32)
    h = jnp.maximum(h + b3_ref[...], 0.0)

    # Layer 4 (no activation), lane-dense: padded to 128 output features.
    h = jnp.dot(h.astype(w4_ref.dtype), w4_ref[...],
                preferred_element_type=jnp.float32)
    o_ref[...] = (h + b4_ref[...]).astype(o_ref.dtype)


# ---------------------------------------------------------------------------
# One-time parameter prep (hoisted out of the per-call wrapper)
# ---------------------------------------------------------------------------
def prepare_policy_encoder_params(params, embed_dim, num_actions,
                                  *, compute_dtype=jnp.bfloat16):
    """Cast weights to the MXU compute dtype and zero-pad the final layer to a
    lane-dense 128-wide output. Do this once (at init / param update), not per
    forward call."""
    (w1, b1), (w2, b2), (w3, b3), (w4, b4) = params
    out_dim = embed_dim * num_actions
    out_pad = _round_up(out_dim, 128)

    w1c = w1.astype(jnp.float32)                      # layer 1 stays f32
    b1c = b1.astype(jnp.float32).reshape(1, -1)
    w2c = w2.astype(compute_dtype)
    b2c = b2.astype(jnp.float32).reshape(1, -1)
    w3c = w3.astype(compute_dtype)
    b3c = b3.astype(jnp.float32).reshape(1, -1)
    w4c = jnp.zeros((w4.shape[0], out_pad), compute_dtype)
    w4c = w4c.at[:, :out_dim].set(w4.astype(compute_dtype))
    b4c = jnp.zeros((1, out_pad), jnp.float32)
    b4c = b4c.at[:, :out_dim].set(b4.astype(jnp.float32).reshape(1, -1))
    return (w1c, b1c, w2c, b2c, w3c, b3c, w4c, b4c)


# ---------------------------------------------------------------------------
# Tile selection
# ---------------------------------------------------------------------------
def _choose_batch_tile(B, *, tb_max=2048, granule=128, small_granule=16,
                       small_batch=256):
    """Pick the per-grid-step batch tile.

    * Big tiles (up to tb_max) amortize the ~0.35 us/step pipeline overhead.
    * Once B > small_batch, keep an even grid of >= 2 tiles so v7x's
      "parallel" batch axis shards across both TensorCores.
    * Tiles are multiples of 128 (full MXU M-passes, matters on v5e);
      per-call sizing via cdiv avoids up to ~2x padding waste at awkward B.
    * Tiny batches: one tile rounded up to 16 (minimal padding; overhead
      dominates there regardless).
    """
    if B <= small_batch:
        return _round_up(max(B, 1), small_granule)
    n_tiles = max(2, pl.cdiv(B, tb_max))
    if n_tiles % 2:
        n_tiles += 1
    return _round_up(pl.cdiv(B, n_tiles), granule)


# ---------------------------------------------------------------------------
# Forward wrapper
# ---------------------------------------------------------------------------
def policy_encoder_forward(x, prepped_params, embed_dim, num_actions, *,
                           out_dtype=jnp.float32, tb_max=2048):
    """x: (B, state_size) f32 -> (B, embed_dim, num_actions) in out_dtype.

    `prepped_params` comes from prepare_policy_encoder_params(). Use
    out_dtype=jnp.bfloat16 to halve the output HBM writeback (main stream on
    v6e/v7x) when the consumer tolerates bf16.
    """
    w1c, b1c, w2c, b2c, w3c, b3c, w4c, b4c = prepped_params
    B, S = x.shape
    out_dim = embed_dim * num_actions
    out_pad = w4c.shape[1]

    if B == 0:  # grid=(0,) is not a valid pallas_call
        return jnp.zeros((0, embed_dim, num_actions), out_dtype)

    TB = _choose_batch_tile(B, tb_max=tb_max)
    B_pad = _round_up(B, TB)

    xf = x.astype(jnp.float32)            # kernel reads f32 directly
    if B_pad != B:
        xf = jnp.pad(xf, ((0, B_pad - B), (0, 0)))

    def full_block(a):
        nd = a.ndim
        return pl.BlockSpec(a.shape, lambda i, _nd=nd: (0,) * _nd)

    flops = 2 * B_pad * (S * HIDDEN + 2 * HIDDEN * HIDDEN + HIDDEN * out_pad)
    bytes_accessed = int(
        xf.size * xf.dtype.itemsize
        + B_pad * out_pad * jnp.dtype(out_dtype).itemsize
        + sum(int(a.size) * a.dtype.itemsize
              for a in (w1c, b1c, w2c, b2c, w3c, b3c, w4c, b4c)))

    flat = pl.pallas_call(
        _policy_encoder_kernel,
        out_shape=jax.ShapeDtypeStruct((B_pad, out_pad), out_dtype),
        grid=(B_pad // TB,),
        in_specs=[pl.BlockSpec((TB, S), lambda i: (i, 0)),   # streamed activations
                  full_block(w1c), full_block(b1c),          # weights stay resident
                  full_block(w2c), full_block(b2c),
                  full_block(w3c), full_block(b3c),
                  full_block(w4c), full_block(b4c)],
        out_specs=pl.BlockSpec((TB, out_pad), lambda i: (i, 0)),
        compiler_params=pltpu.CompilerParams(
            dimension_semantics=("parallel",),
            vmem_limit_bytes=32 * 1024 * 1024),   # raise v5e's 16 MiB default
        cost_estimate=pl.CostEstimate(flops=flops, transcendentals=0,
                                      bytes_accessed=bytes_accessed),
    )(xf, w1c, b1c, w2c, b2c, w3c, b3c, w4c, b4c)

    # TODO(synk): if the consumer tolerates the padded (B_pad, 128) layout,
    # fold this slice+reshape into it to avoid one extra full-output copy.
    return flat[:B, :out_dim].reshape(-1, embed_dim, num_actions)


# ---------------------------------------------------------------------------
# Init + pure-JAX reference
# ---------------------------------------------------------------------------
def init_policy_encoder_params(key, state_size, embed_dim, num_actions):
    """Deterministic init mimicking torch.nn.Linear (U[-1/sqrt(fan_in), ...]).
    Weights stored transposed (in_features, out_features), f32. Biases (out,)."""
    dims = [state_size, HIDDEN, HIDDEN, HIDDEN, embed_dim * num_actions]
    params = []
    for i in range(4):
        fan_in, fan_out = dims[i], dims[i + 1]
        key, kw, kb = jax.random.split(key, 3)
        bound = 1.0 / jnp.sqrt(jnp.float32(fan_in))
        w = jax.random.uniform(kw, (fan_in, fan_out), jnp.float32, -bound, bound)
        b = jax.random.uniform(kb, (fan_out,), jnp.float32, -bound, bound)
        params.append((w, b))
    return params


def _reference_forward(x, params, embed_dim, num_actions):
    (w1, b1), (w2, b2), (w3, b3), (w4, b4) = params
    h = jnp.maximum(x @ w1 + b1, 0.0)
    h = jnp.maximum(h @ w2 + b2, 0.0)
    h = jnp.maximum(h @ w3 + b3, 0.0)
    h = h @ w4 + b4
    return h.reshape(-1, embed_dim, num_actions)


if __name__ == "__main__":
    # Small shapes consistent with the module:
    # state_size=(32,), action_size=(4,), embed_dim=16, batch=8.
    B, STATE, ACTIONS, EMBED = 8, 32, 4, 16

    key = jax.random.PRNGKey(0)
    key, kx = jax.random.split(key)
    x = jax.random.normal(kx, (B, STATE), jnp.float32)

    params = init_policy_encoder_params(key, STATE, EMBED, ACTIONS)
    prepped = prepare_policy_encoder_params(params, EMBED, ACTIONS)
    ref = _reference_forward(x, params, EMBED, ACTIONS)

    # Default f32 output path.
    out = policy_encoder_forward(x, prepped, EMBED, ACTIONS)
    out = jax.block_until_ready(out)
    assert out.shape == (B, EMBED, ACTIONS), out.shape
    # Layers 2-4 use bf16 MXU inputs + f32 accumulation -> loosened tolerance.
    assert jnp.allclose(out, ref, atol=5e-2, rtol=5e-2), "mismatch vs reference (f32 out)"

    # bf16 output writeback path (halves dominant HBM stream on v6e/v7x).
    out_bf16 = policy_encoder_forward(x, prepped, EMBED, ACTIONS,
                                      out_dtype=jnp.bfloat16)
    out_bf16 = jax.block_until_ready(out_bf16)
    assert out_bf16.shape == (B, EMBED, ACTIONS), out_bf16.shape
    assert jnp.allclose(out_bf16.astype(jnp.float32), ref, atol=1e-1, rtol=1e-1), \
        "mismatch vs reference (bf16 out)"

    print("KERNEL_OK")
</pallas_src>

<mosaic_0001>
module attributes {stable_mosaic.version = 11 : i64} {
  func.func @_policy_encoder_kernel(%arg0: i32, %arg1: memref<16x32xf32, #tpu.memory_space<vmem>>, %arg2: memref<32x256xf32, #tpu.memory_space<vmem>>, %arg3: memref<1x256xf32, #tpu.memory_space<vmem>>, %arg4: memref<256x256xbf16, #tpu.memory_space<vmem>>, %arg5: memref<1x256xf32, #tpu.memory_space<vmem>>, %arg6: memref<256x256xbf16, #tpu.memory_space<vmem>>, %arg7: memref<1x256xf32, #tpu.memory_space<vmem>>, %arg8: memref<256x128xbf16, #tpu.memory_space<vmem>>, %arg9: memref<1x128xf32, #tpu.memory_space<vmem>>, %arg10: memref<16x128xf32, #tpu.memory_space<vmem>>) attributes {dimension_semantics = [#tpu.dimension_semantics<parallel>], iteration_bounds = array<i64: 1>, scalar_prefetch = 0 : i64, scratch_operands = 0 : i64, tpu.core_type = #tpu.core_type<tc>, window_params = [{transform_indices = @transform_0, window_bounds = array<i64: 16, 32>}, {pipeline_mode = #tpu.pipeline_mode<synchronous>, transform_indices = @transform_1, window_bounds = array<i64: 32, 256>}, {pipeline_mode = #tpu.pipeline_mode<synchronous>, transform_indices = @transform_2, window_bounds = array<i64: 1, 256>}, {pipeline_mode = #tpu.pipeline_mode<synchronous>, transform_indices = @transform_3, window_bounds = array<i64: 256, 256>}, {pipeline_mode = #tpu.pipeline_mode<synchronous>, transform_indices = @transform_4, window_bounds = array<i64: 1, 256>}, {pipeline_mode = #tpu.pipeline_mode<synchronous>, transform_indices = @transform_5, window_bounds = array<i64: 256, 256>}, {pipeline_mode = #tpu.pipeline_mode<synchronous>, transform_indices = @transform_6, window_bounds = array<i64: 1, 256>}, {pipeline_mode = #tpu.pipeline_mode<synchronous>, transform_indices = @transform_7, window_bounds = array<i64: 256, 128>}, {pipeline_mode = #tpu.pipeline_mode<synchronous>, transform_indices = @transform_8, window_bounds = array<i64: 1, 128>}, {transform_indices = @transform_9, window_bounds = array<i64: 16, 128>}]} {
    %c0 = arith.constant 0 : index
    %c0_0 = arith.constant 0 : index
    %0 = vector.load %arg1[%c0, %c0_0] : memref<16x32xf32, #tpu.memory_space<vmem>>, vector<16x32xf32>
    %c0_1 = arith.constant 0 : index
    %c0_2 = arith.constant 0 : index
    %1 = vector.load %arg2[%c0_1, %c0_2] : memref<32x256xf32, #tpu.memory_space<vmem>>, vector<32x256xf32>
    %cst = arith.constant dense<0.000000e+00> : vector<16x256xf32>
    %2 = tpu.matmul %0, %1, %cst {dimension_numbers = #tpu.dot_dimension_numbers<[1], [0], [0], [1], [0, 0, 1, 1], [], []>} : vector<16x32xf32>, vector<32x256xf32>, vector<16x256xf32> -> vector<16x256xf32>
    %c0_3 = arith.constant 0 : index
    %c0_4 = arith.constant 0 : index
    %3 = vector.load %arg3[%c0_3, %c0_4] : memref<1x256xf32, #tpu.memory_space<vmem>>, vector<1x256xf32>
    %4 = vector.broadcast %3 : vector<1x256xf32> to vector<16x256xf32>
    %5 = arith.addf %2, %4 : vector<16x256xf32>
    %cst_5 = arith.constant 0.000000e+00 : f32
    %6 = vector.broadcast %cst_5 : f32 to vector<16x256xf32>
    %7 = arith.maximumf %5, %6 : vector<16x256xf32>
    %8 = arith.truncf %7 : vector<16x256xf32> to vector<16x256xbf16>
    %c0_6 = arith.constant 0 : index
    %c0_7 = arith.constant 0 : index
    %9 = vector.load %arg4[%c0_6, %c0_7] : memref<256x256xbf16, #tpu.memory_space<vmem>>, vector<256x256xbf16>
    %cst_8 = arith.constant dense<0.000000e+00> : vector<16x256xf32>
    %10 = tpu.matmul %8, %9, %cst_8 {dimension_numbers = #tpu.dot_dimension_numbers<[1], [0], [0], [1], [0, 0, 1, 1], [], []>} : vector<16x256xbf16>, vector<256x256xbf16>, vector<16x256xf32> -> vector<16x256xf32>
    %c0_9 = arith.constant 0 : index
    %c0_10 = arith.constant 0 : index
    %11 = vector.load %arg5[%c0_9, %c0_10] : memref<1x256xf32, #tpu.memory_space<vmem>>, vector<1x256xf32>
    %12 = vector.broadcast %11 : vector<1x256xf32> to vector<16x256xf32>
    %13 = arith.addf %10, %12 : vector<16x256xf32>
    %cst_11 = arith.constant 0.000000e+00 : f32
    %14 = vector.broadcast %cst_11 : f32 to vector<16x256xf32>
    %15 = arith.maximumf %13, %14 : vector<16x256xf32>
    %16 = arith.truncf %15 : vector<16x256xf32> to vector<16x256xbf16>
    %c0_12 = arith.constant 0 : index
    %c0_13 = arith.constant 0 : index
    %17 = vector.load %arg6[%c0_12, %c0_13] : memref<256x256xbf16, #tpu.memory_space<vmem>>, vector<256x256xbf16>
    %cst_14 = arith.constant dense<0.000000e+00> : vector<16x256xf32>
    %18 = tpu.matmul %16, %17, %cst_14 {dimension_numbers = #tpu.dot_dimension_numbers<[1], [0], [0], [1], [0, 0, 1, 1], [], []>} : vector<16x256xbf16>, vector<256x256xbf16>, vector<16x256xf32> -> vector<16x256xf32>
    %c0_15 = arith.constant 0 : index
    %c0_16 = arith.constant 0 : index
    %19 = vector.load %arg7[%c0_15, %c0_16] : memref<1x256xf32, #tpu.memory_space<vmem>>, vector<1x256xf32>
    %20 = vector.broadcast %19 : vector<1x256xf32> to vector<16x256xf32>
    %21 = arith.addf %18, %20 : vector<16x256xf32>
    %cst_17 = arith.constant 0.000000e+00 : f32
    %22 = vector.broadcast %cst_17 : f32 to vector<16x256xf32>
    %23 = arith.maximumf %21, %22 : vector<16x256xf32>
    %24 = arith.truncf %23 : vector<16x256xf32> to vector<16x256xbf16>
    %c0_18 = arith.constant 0 : index
    %c0_19 = arith.constant 0 : index
    %25 = vector.load %arg8[%c0_18, %c0_19] : memref<256x128xbf16, #tpu.memory_space<vmem>>, vector<256x128xbf16>
    %cst_20 = arith.constant dense<0.000000e+00> : vector<16x128xf32>
    %26 = tpu.matmul %24, %25, %cst_20 {dimension_numbers = #tpu.dot_dimension_numbers<[1], [0], [0], [1], [0, 0, 1, 1], [], []>} : vector<16x256xbf16>, vector<256x128xbf16>, vector<16x128xf32> -> vector<16x128xf32>
    %c0_21 = arith.constant 0 : index
    %c0_22 = arith.constant 0 : index
    %27 = vector.load %arg9[%c0_21, %c0_22] : memref<1x128xf32, #tpu.memory_space<vmem>>, vector<1x128xf32>
    %28 = vector.broadcast %27 : vector<1x128xf32> to vector<16x128xf32>
    %29 = arith.addf %26, %28 : vector<16x128xf32>
    %c0_23 = arith.constant 0 : index
    %c0_24 = arith.constant 0 : index
    %30 = vector.load %arg10[%c0_23, %c0_24] : memref<16x128xf32, #tpu.memory_space<vmem>>, vector<16x128xf32>
    tpu.vector_store %arg10[%c0_23, %c0_24], %29 {strides = array<i32>} : memref<16x128xf32, #tpu.memory_space<vmem>>, vector<16x128xf32>,
    return
  }
  func.func @transform_0(%arg0: i32) -> (i32, i32) {
    %c0_i32 = arith.constant 0 : i32
    %c0_i32_0 = arith.constant 0 : i32
    return %arg0, %c0_i32 : i32, i32
  }
  func.func @transform_1(%arg0: i32) -> (i32, i32) {
    %c0_i32 = arith.constant 0 : i32
    %c0_i32_0 = arith.constant 0 : i32
    %c0_i32_1 = arith.constant 0 : i32
    return %c0_i32, %c0_i32_0 : i32, i32
  }
  func.func @transform_2(%arg0: i32) -> (i32, i32) {
    %c0_i32 = arith.constant 0 : i32
    %c0_i32_0 = arith.constant 0 : i32
    %c0_i32_1 = arith.constant 0 : i32
    return %c0_i32, %c0_i32_0 : i32, i32
  }
  func.func @transform_3(%arg0: i32) -> (i32, i32) {
    %c0_i32 = arith.constant 0 : i32
    %c0_i32_0 = arith.constant 0 : i32
    %c0_i32_1 = arith.constant 0 : i32
    return %c0_i32, %c0_i32_0 : i32, i32
  }
  func.func @transform_4(%arg0: i32) -> (i32, i32) {
    %c0_i32 = arith.constant 0 : i32
    %c0_i32_0 = arith.constant 0 : i32
    %c0_i32_1 = arith.constant 0 : i32
    return %c0_i32, %c0_i32_0 : i32, i32
  }
  func.func @transform_5(%arg0: i32) -> (i32, i32) {
    %c0_i32 = arith.constant 0 : i32
    %c0_i32_0 = arith.constant 0 : i32
    %c0_i32_1 = arith.constant 0 : i32
    return %c0_i32, %c0_i32_0 : i32, i32
  }
  func.func @transform_6(%arg0: i32) -> (i32, i32) {
    %c0_i32 = arith.constant 0 : i32
    %c0_i32_0 = arith.constant 0 : i32
    %c0_i32_1 = arith.constant 0 : i32
    return %c0_i32, %c0_i32_0 : i32, i32
  }
  func.func @transform_7(%arg0: i32) -> (i32, i32) {
    %c0_i32 = arith.constant 0 : i32
    %c0_i32_0 = arith.constant 0 : i32
    %c0_i32_1 = arith.constant 0 : i32
    return %c0_i32, %c0_i32_0 : i32, i32
  }
  func.func @transform_8(%arg0: i32) -> (i32, i32) {
    %c0_i32 = arith.constant 0 : i32
    %c0_i32_0 = arith.constant 0 : i32
    %c0_i32_1 = arith.constant 0 : i32
    return %c0_i32, %c0_i32_0 : i32, i32
  }
  func.func @transform_9(%arg0: i32) -> (i32, i32) {
    %c0_i32 = arith.constant 0 : i32
    %c0_i32_0 = arith.constant 0 : i32
    return %arg0, %c0_i32 : i32, i32
  }
}

</mosaic_0001>

<llo_original>
// kernel: tpu_custom_call.1
$region0: #{tpu_custom_call.1}
  #allocation0 [shape = 'u32[]', space=smem, size = 0x4, offset = 0x4, fixed_abs, tag = 'smem constant byte address 0x4 - core index']
  #allocation1 [shape = 'u32[144,128]{1,0:T(1,128)}', space=vmem, size = 0x12000, scoped, tag = 'internal scratch']
  %s0 = inlined_call_operand.hbm [shape: f32[16,32], index: 0, kind: input, shape index: {}]
  %s1 = inlined_call_operand.hbm [shape: f32[32,256], index: 1, kind: input, shape index: {}]
  %s2 = inlined_call_operand.vmem [shape: f32[1,256], index: 2, kind: input, shape index: {}]
  %s3 = inlined_call_operand.hbm [shape: bf16[256,256], index: 3, kind: input, shape index: {}]
  %s4 = inlined_call_operand.vmem [shape: f32[1,256], index: 4, kind: input, shape index: {}]
  %s5 = inlined_call_operand.hbm [shape: bf16[256,256], index: 5, kind: input, shape index: {}]
  %s6 = inlined_call_operand.vmem [shape: f32[1,256], index: 6, kind: input, shape index: {}]
  %s7 = inlined_call_operand.hbm [shape: bf16[256,128], index: 7, kind: input, shape index: {}]
  %s8 = inlined_call_operand.vmem [shape: f32[1,128], index: 8, kind: input, shape index: {}]
  %s9 = inlined_call_operand.hbm [shape: f32[16,128], index: 9, kind: output, shape index: {}]
  %s10 = sld [smem:[#allocation0]]
  $region66: #{tpu_custom_call.1} parent=0
    _
  %s12 = ssub.s32 1, %s10
  %s13 = scalar_select 0, %s12, %s10
  $region1: #{tpu_custom_call.1} parent=0
    #allocation2 [shape = 'u8[8192]{0}', space=vmem, size = 0x2000, scoped, tag = 'input window, operand 0, single buffered']
    #allocation3 [shape = 's32[1]{0}', space=sflag, size = 0x4, scoped, tag = 'scoped memory for tpu_custom_call.1']
    #allocation4 [shape = 's32[1]{0}', space=sflag, size = 0x4, scoped, tag = 'scoped memory for tpu_custom_call.1']
    #allocation5 [shape = 'u8[32768]{0}', space=vmem, size = 0x8000, scoped, tag = 'input window, operand 1, single buffered']
    #allocation6 [shape = 's32[1]{0}', space=sflag, size = 0x4, scoped, tag = 'scoped memory for tpu_custom_call.1']
    #allocation7 [shape = 'u8[131072]{0}', space=vmem, size = 0x20000, scoped, tag = 'input window, operand 3, single buffered']
    #allocation8 [shape = 'u8[131072]{0}', space=vmem, size = 0x20000, scoped, tag = 'input window, operand 5, single buffered']
    #allocation9 [shape = 's32[1]{0}', space=sflag, size = 0x4, scoped, tag = 'scoped memory for tpu_custom_call.1']
    #allocation10 [shape = 'u8[65536]{0}', space=vmem, size = 0x10000, scoped, tag = 'input window, operand 7, single buffered']
    #allocation11 [shape = 'u8[8192]{0}', space=vmem, size = 0x2000, scoped, tag = 'output window, operand 0, single buffered']
    %14 = vsyncpa [#allocation3], 0
    %15 = vsyncpa [#allocation6], 0
    %16 = vsyncpa [#allocation9], 0
    %17 = vsyncpa [#allocation4], 0
    // Predicated region
    $region2: #{tpu_custom_call.1} parent=1 // pred_check
      _
    $region3: #{tpu_custom_call.1} parent=1 // pred_check_branch
      %19 = sbr.rel (0) target = $region5
    $region4: #{tpu_custom_call.1} parent=1 // pred_region
      %s21 = ssub.s32 256, 256
      %22 = vsyncadd [#allocation3], %s21
      %s23 = sshll.u32 [#allocation2], 4
      %s24 = int_to_ptr.vmem [resolvable:$true] %s23
      %29 = dma.hbm_to_vmem [thread:$0]  %s0, 256, %s24, [#allocation3], 128, 128, 8
    $region5: #{tpu_custom_call.1} parent=1 // pred_fallthru
      _
    // Predicated region
    $region6: #{tpu_custom_call.1} parent=1 // pred_check
      _
    $region7: #{tpu_custom_call.1} parent=1 // pred_check_branch
      %31 = sbr.rel (0) target = $region9
    $region8: #{tpu_custom_call.1} parent=1 // pred_region
      %s33 = ssub.s32 1024, 1024
      %34 = vsyncadd [#allocation6], %s33
      %s35 = sshll.u32 [#allocation5], 4
      %s36 = int_to_ptr.vmem [resolvable:$true] %s35
      %41 = dma.hbm_to_vmem [thread:$0]  %s1, 1024, %s36, [#allocation6], 256, 256, 16
    $region9: #{tpu_custom_call.1} parent=1 // pred_fallthru
      _
    // Predicated region
    $region10: #{tpu_custom_call.1} parent=1 // pred_check
      _
    $region11: #{tpu_custom_call.1} parent=1 // pred_check_branch
      %43 = sbr.rel (0) target = $region13
    $region12: #{tpu_custom_call.1} parent=1 // pred_region
      _
    $region13: #{tpu_custom_call.1} parent=1 // pred_fallthru
      _
    // Predicated region
    $region14: #{tpu_custom_call.1} parent=1 // pred_check
      _
    $region15: #{tpu_custom_call.1} parent=1 // pred_check_branch
      %45 = sbr.rel (0) target = $region17
    $region16: #{tpu_custom_call.1} parent=1 // pred_region
      %s47 = ssub.s32 4096, 4096
      %48 = vsyncadd [#allocation6], %s47
      %s49 = sshll.u32 [#allocation7], 4
      %s50 = int_to_ptr.vmem [resolvable:$true] %s49
      %55 = dma.hbm_to_vmem [thread:$0]  %s3, 4096, %s50, [#allocation6], 128, 128, 8
    $region17: #{tpu_custom_call.1} parent=1 // pred_fallthru
      _
    // Predicated region
    $region18: #{tpu_custom_call.1} parent=1 // pred_check
      _
    $region19: #{tpu_custom_call.1} parent=1 // pred_check_branch
      %57 = sbr.rel (0) target = $region21
    $region20: #{tpu_custom_call.1} parent=1 // pred_region
      _
    $region21: #{tpu_custom_call.1} parent=1 // pred_fallthru
      _
    // Predicated region
    $region22: #{tpu_custom_call.1} parent=1 // pred_check
      _
    $region23: #{tpu_custom_call.1} parent=1 // pred_check_branch
      %59 = sbr.rel (0) target = $region25
    $region24: #{tpu_custom_call.1} parent=1 // pred_region
      %s61 = ssub.s32 4096, 4096
      %62 = vsyncadd [#allocation9], %s61
      %s63 = sshll.u32 [#allocation8], 4
      %s64 = int_to_ptr.vmem [resolvable:$true] %s63
      %69 = dma.hbm_to_vmem [thread:$0]  %s5, 4096, %s64, [#allocation9], 128, 128, 8
    $region25: #{tpu_custom_call.1} parent=1 // pred_fallthru
      _
    // Predicated region
    $region26: #{tpu_custom_call.1} parent=1 // pred_check
      _
    $region27: #{tpu_custom_call.1} parent=1 // pred_check_branch
      %71 = sbr.rel (0) target = $region29
    $region28: #{tpu_custom_call.1} parent=1 // pred_region
      _
    $region29: #{tpu_custom_call.1} parent=1 // pred_fallthru
      _
    // Predicated region
    $region30: #{tpu_custom_call.1} parent=1 // pred_check
      _
    $region31: #{tpu_custom_call.1} parent=1 // pred_check_branch
      %73 = sbr.rel (0) target = $region33
    $region32: #{tpu_custom_call.1} parent=1 // pred_region
      %s75 = ssub.s32 2048, 2048
      %76 = vsyncadd [#allocation9], %s75
      %s77 = sshll.u32 [#allocation10], 4
      %s78 = int_to_ptr.vmem [resolvable:$true] %s77
      %83 = dma.hbm_to_vmem [thread:$0]  %s7, 2048, %s78, [#allocation9], 64, 64, 4
    $region33: #{tpu_custom_call.1} parent=1 // pred_fallthru
      _
    // Predicated region
    $region34: #{tpu_custom_call.1} parent=1 // pred_check
      _
    $region35: #{tpu_custom_call.1} parent=1 // pred_check_branch
      %85 = sbr.rel (0) target = $region37
    $region36: #{tpu_custom_call.1} parent=1 // pred_region
      _
    $region37: #{tpu_custom_call.1} parent=1 // pred_fallthru
      _
    // Predicated region
    $region38: #{tpu_custom_call.1} parent=1 // pred_check
      _
    $region39: #{tpu_custom_call.1} parent=1 // pred_check_branch
      %87 = sbr.rel (0) target = $region41
    $region40: #{tpu_custom_call.1} parent=1 // pred_region
      %88 = dma.done [#allocation3], 256
    $region41: #{tpu_custom_call.1} parent=1 // pred_fallthru
      _
    // Predicated region
    $region42: #{tpu_custom_call.1} parent=1 // pred_check
      _
    $region43: #{tpu_custom_call.1} parent=1 // pred_check_branch
      %90 = sbr.rel (0) target = $region45
    $region44: #{tpu_custom_call.1} parent=1 // pred_region
      %91 = dma.done [#allocation6], 1024
    $region45: #{tpu_custom_call.1} parent=1 // pred_fallthru
      _
    // Predicated region
    $region46: #{tpu_custom_call.1} parent=1 // pred_check
      _
    $region47: #{tpu_custom_call.1} parent=1 // pred_check_branch
      %93 = sbr.rel (0) target = $region49
    $region48: #{tpu_custom_call.1} parent=1 // pred_region
      %94 = dma.done [#allocation6], 4096
    $region49: #{tpu_custom_call.1} parent=1 // pred_fallthru
      _
    // Predicated region
    $region50: #{tpu_custom_call.1} parent=1 // pred_check
      _
    $region51: #{tpu_custom_call.1} parent=1 // pred_check_branch
      %96 = sbr.rel (0) target = $region53
    $region52: #{tpu_custom_call.1} parent=1 // pred_region
      %97 = dma.done [#allocation9], 4096
    $region53: #{tpu_custom_call.1} parent=1 // pred_fallthru
      _
    // Predicated region
    $region54: #{tpu_custom_call.1} parent=1 // pred_check
      _
    $region55: #{tpu_custom_call.1} parent=1 // pred_check_branch
      %99 = sbr.rel (0) target = $region57
    $region56: #{tpu_custom_call.1} parent=1 // pred_region
      %100 = dma.done [#allocation9], 2048
    $region57: #{tpu_custom_call.1} parent=1 // pred_fallthru
      _
    %v102 = vld [vmem:[#allocation2] sm:$0xff]
    %v103 = vld [vmem:[#allocation2 + $0x8] sm:$0xff]
    %v104 = vld [vmem:[#allocation5] sm:$0xff]
    %v105 = vld [vmem:[#allocation5 + $0x8] sm:$0xff]
    %v106 = vld [vmem:[#allocation5 + $0x10] sm:$0xff]
    %v107 = vld [vmem:[#allocation5 + $0x18] sm:$0xff]
    %v108 = vld [vmem:[#allocation5 + $0x20] sm:$0xff]
    %v109 = vld [vmem:[#allocation5 + $0x28] sm:$0xff]
    %v110 = vld [vmem:[#allocation5 + $0x30] sm:$0xff]
    %v111 = vld [vmem:[#allocation5 + $0x38] sm:$0xff]
    %v112 = vld [vmem:[%s2] sm:$0x3]
    %v114 = vlaneseq
    %v115 = vshrl.u32 %v114, 7
    %v116 = vsub.s32 0, %v115
    %v117 = vrot.slane %v112, %v116
    %v118 = vlaneseq
    %v119 = vshrl.u32 %v118, 7
    %v120 = vsub.s32 1, %v119
    %v121 = vrot.slane %v112, %v120
    %vm124 = vcmask 261120
    %v126 = vsel %vm124, %v102, 0
    %v129 = vsel %vm124, %v103, 0
    %131 = vmatprep.subr.mxu0 0.0
    %132 = vmatpush1.msra.mxu0 0.0
    %133 = vmatprep.subr.mxu0 0.0
    %134 = vmatpush1.msra.mxu0 0.0
    %135 = vmatprep.subr.mxu0 0.0
    %136 = vmatpush1.msra.mxu0 0.0
    %137 = vmatprep.subr.mxu0 0.0
    %138 = vmatpush1.msra.mxu0 0.0
    %139 = vmatprep.subr.mxu0 0.0
    %140 = vmatpush1.msra.mxu0 0.0
    %141 = vmatprep.subr.mxu0 0.0
    %142 = vmatpush1.msra.mxu0 0.0
    %143 = vmatprep.subr.mxu0 0.0
    %144 = vmatpush1.msra.mxu0 0.0
    %145 = vmatprep.subr.mxu0 0.0
    %146 = vmatpush1.msra.mxu0 0.0
    %147 = vmatprep.subr.mxu0 0.0
    %148 = vmatpush1.msra.mxu0 0.0
    %149 = vmatprep.subr.mxu0 0.0
    %150 = vmatpush1.msra.mxu0 0.0
    %151 = vmatprep.subr.mxu0 0.0
    %152 = vmatpush1.msra.mxu0 0.0
    %153 = vmatprep.subr.mxu0 0.0
    %154 = vmatpush1.msra.mxu0 0.0
    %155 = vmatprep.subr.mxu0 %v111
    %156 = vmatpush1.msra.mxu0 %v110
    %157 = vmatprep.subr.mxu0 %v109
    %158 = vmatpush1.msra.mxu0 %v108
    %159 = vmatprep.subr.mxu0 %v107
    %160 = vmatpush1.msra.mxu0 %v106
    %161 = vmatprep.subr.mxu0 %v105
    %162 = vmatpush1.msra.mxu0 %v104
    %163 = vmatprep.subr.mxu0 0.0
    %164 = vmatpush2.msra.mxu0 0.0
    %165 = vmatprep.subr.mxu0 0.0
    %166 = vmatpush2.msra.mxu0 0.0
    %167 = vmatprep.subr.mxu0 0.0
    %168 = vmatpush2.msra.mxu0 0.0
    %169 = vmatprep.subr.mxu0 0.0
    %170 = vmatpush2.msra.mxu0 0.0
    %171 = vmatprep.subr.mxu0 0.0
    %172 = vmatpush2.msra.mxu0 0.0
    %173 = vmatprep.subr.mxu0 0.0
    %174 = vmatpush2.msra.mxu0 0.0
    %175 = vmatprep.subr.mxu0 0.0
    %176 = vmatpush2.msra.mxu0 0.0
    %177 = vmatprep.subr.mxu0 0.0
    %178 = vmatpush2.msra.mxu0 0.0
    %179 = vmatprep.subr.mxu0 0.0
    %180 = vmatpush2.msra.mxu0 0.0
    %181 = vmatprep.subr.mxu0 0.0
    %182 = vmatpush2.msra.mxu0 0.0
    %183 = vmatprep.subr.mxu0 0.0
    %184 = vmatpush2.msra.mxu0 0.0
    %185 = vmatprep.subr.mxu0 0.0
    %186 = vmatpush2.msra.mxu0 0.0
    %187 = vmatprep.subr.mxu0 0.0
    %188 = vmatpush2.msra.mxu0 0.0
    %189 = vmatprep.subr.mxu0 0.0
    %190 = vmatpush2.msra.mxu0 0.0
    %191 = vmatprep.subr.mxu0 0.0
    %192 = vmatpush2.msra.mxu0 0.0
    %193 = vmatprep.subr.mxu0 0.0
    %194 = vmatpush2.msra.mxu0 0.0
    %195 = vmatprep.mubr.f32.mxu0 0.0
    %196 = vmatmul.mubr.f32.gmra.mxu0 %v126
    %v197 = vpop.f32.mrf.mxu0
    %v198 = vadd.f32 %v117, %v197
    %v199 = vpop.f32.mrf.mxu0
    %v200 = vadd.f32 %v121, %v199
    %201 = vmatprep.mubr.f32.mxu0 0.0
    %202 = vmatmul.mubr.f32.gmra.mxu0 %v129
    %v203 = vpop.f32.mrf.mxu0
    %v204 = vadd.f32 %v117, %v203
    %v205 = vpop.f32.mrf.mxu0
    %v206 = vadd.f32 %v121, %v205
    %207 = vdwg.mxu0
    %v208 = vmax.f32 %v198, 0.0
    %v209 = vmax.f32 %v200, 0.0
    %v210 = vmax.f32 %v204, 0.0
    %v211 = vmax.f32 %v206, 0.0
    %v212 = vpack.c.bf16 %v210, %v208
    %v213 = vpack.c.bf16 %v211, %v209
    %v214 = vld [vmem:[#allocation7] sm:$0xff]
    %v215 = vld [vmem:[#allocation7 + $0x8] sm:$0xff]
    %v216 = vld [vmem:[#allocation7 + $0x10] sm:$0xff]
    %v217 = vld [vmem:[#allocation7 + $0x18] sm:$0xff]
    %v218 = vld [vmem:[#allocation7 + $0x20] sm:$0xff]
    %v219 = vld [vmem:[#allocation7 + $0x28] sm:$0xff]
    %v220 = vld [vmem:[#allocation7 + $0x30] sm:$0xff]
    %v221 = vld [vmem:[#allocation7 + $0x38] sm:$0xff]
    %v222 = vld [vmem:[#allocation7 + $0x40] sm:$0xff]
    %v223 = vld [vmem:[#allocation7 + $0x48] sm:$0xff]
    %v224 = vld [vmem:[#allocation7 + $0x50] sm:$0xff]
    %v225 = vld [vmem:[#allocation7 + $0x58] sm:$0xff]
    %v226 = vld [vmem:[#allocation7 + $0x60] sm:$0xff]
    %v227 = vld [vmem:[#allocation7 + $0x68] sm:$0xff]
    %v228 = vld [vmem:[#allocation7 + $0x70] sm:$0xff]
    %v229 = vld [vmem:[#allocation7 + $0x78] sm:$0xff]
    %v230 = vld [vmem:[#allocation7 + $0x80] sm:$0xff]
    %v231 = vld [vmem:[#allocation7 + $0x88] sm:$0xff]
    %v232 = vld [vmem:[#allocation7 + $0x90] sm:$0xff]
    %v233 = vld [vmem:[#allocation7 + $0x98] sm:$0xff]
    %v234 = vld [vmem:[#allocation7 + $0xa0] sm:$0xff]
    %v235 = vld [vmem:[#allocation7 + $0xa8] sm:$0xff]
    %v236 = vld [vmem:[#allocation7 + $0xb0] sm:$0xff]
    %v237 = vld [vmem:[#allocation7 + $0xb8] sm:$0xff]
    %v238 = vld [vmem:[#allocation7 + $0xc0] sm:$0xff]
    %v239 = vld [vmem:[#allocation7 + $0xc8] sm:$0xff]
    %v240 = vld [vmem:[#allocation7 + $0xd0] sm:$0xff]
    %v241 = vld [vmem:[#allocation7 + $0xd8] sm:$0xff]
    %v242 = vld [vmem:[#allocation7 + $0xe0] sm:$0xff]
    %v243 = vld [vmem:[#allocation7 + $0xe8] sm:$0xff]
    %v244 = vld [vmem:[#allocation7 + $0xf0] sm:$0xff]
    %v245 = vld [vmem:[#allocation7 + $0xf8] sm:$0xff]
    %v246 = vld [vmem:[%s4] sm:$0x3]
    %v248 = vlaneseq
    %v249 = vshrl.u32 %v248, 7
    %v250 = vsub.s32 0, %v249
    %v251 = vrot.slane %v246, %v250
    %v252 = vlaneseq
    %v253 = vshrl.u32 %v252, 7
    %v254 = vsub.s32 1, %v253
    %v255 = vrot.slane %v246, %v254
    %v290 = vunpack.c.l.b16 %v214
    %v291 = vunpack.c.h.b16 %v214
    %v292 = vunpack.c.l.b16 %v215
    %v293 = vunpack.c.h.b16 %v215
    %v294 = vunpack.c.l.b16 %v216
    %v295 = vunpack.c.h.b16 %v216
    %v296 = vunpack.c.l.b16 %v217
    %v297 = vunpack.c.h.b16 %v217
    %v298 = vunpack.c.l.b16 %v218
    %v299 = vunpack.c.h.b16 %v218
    %v300 = vunpack.c.l.b16 %v219
    %v301 = vunpack.c.h.b16 %v219
    %v302 = vunpack.c.l.b16 %v220
    %v303 = vunpack.c.h.b16 %v220
    %v304 = vunpack.c.l.b16 %v221
    %v305 = vunpack.c.h.b16 %v221
    %v306 = vunpack.c.l.b16 %v222
    %v307 = vunpack.c.h.b16 %v222
    %v308 = vunpack.c.l.b16 %v223
    %v309 = vunpack.c.h.b16 %v223
    %v310 = vunpack.c.l.b16 %v224
    %v311 = vunpack.c.h.b16 %v224
    %v312 = vunpack.c.l.b16 %v225
    %v313 = vunpack.c.h.b16 %v225
    %v314 = vunpack.c.l.b16 %v226
    %v315 = vunpack.c.h.b16 %v226
    %v316 = vunpack.c.l.b16 %v227
    %v317 = vunpack.c.h.b16 %v227
    %v318 = vunpack.c.l.b16 %v228
    %v319 = vunpack.c.h.b16 %v228
    %v320 = vunpack.c.l.b16 %v229
    %v321 = vunpack.c.h.b16 %v229
    %v322 = vunpack.c.l.b16 %v230
    %v323 = vunpack.c.h.b16 %v230
    %v324 = vunpack.c.l.b16 %v231
    %v325 = vunpack.c.h.b16 %v231
    %v326 = vunpack.c.l.b16 %v232
    %v327 = vunpack.c.h.b16 %v232
    %v328 = vunpack.c.l.b16 %v233
    %v329 = vunpack.c.h.b16 %v233
    %v330 = vunpack.c.l.b16 %v234
    %v331 = vunpack.c.h.b16 %v234
    %v332 = vunpack.c.l.b16 %v235
    %v333 = vunpack.c.h.b16 %v235
    %v334 = vunpack.c.l.b16 %v236
    %v335 = vunpack.c.h.b16 %v236
    %v336 = vunpack.c.l.b16 %v237
    %v337 = vunpack.c.h.b16 %v237
    %v338 = vunpack.c.l.b16 %v238
    %v339 = vunpack.c.h.b16 %v238
    %v340 = vunpack.c.l.b16 %v239
    %v341 = vunpack.c.h.b16 %v239
    %v342 = vunpack.c.l.b16 %v240
    %v343 = vunpack.c.h.b16 %v240
    %v344 = vunpack.c.l.b16 %v241
    %v345 = vunpack.c.h.b16 %v241
    %v346 = vunpack.c.l.b16 %v242
    %v347 = vunpack.c.h.b16 %v242
    %v348 = vunpack.c.l.b16 %v243
    %v349 = vunpack.c.h.b16 %v243
    %v350 = vunpack.c.l.b16 %v244
    %v351 = vunpack.c.h.b16 %v244
    %v352 = vunpack.c.l.b16 %v245
    %v353 = vunpack.c.h.b16 %v245
    %v354 = vpack.c.b16 %v292, %v290
    %v355 = vpack.c.b16 %v293, %v291
    %v356 = vpack.c.b16 %v296, %v294
    %v357 = vpack.c.b16 %v297, %v295
    %v358 = vpack.c.b16 %v300, %v298
    %v359 = vpack.c.b16 %v301, %v299
    %v360 = vpack.c.b16 %v304, %v302
    %v361 = vpack.c.b16 %v305, %v303
    %v362 = vpack.c.b16 %v308, %v306
    %v363 = vpack.c.b16 %v309, %v307
    %v364 = vpack.c.b16 %v312, %v310
    %v365 = vpack.c.b16 %v313, %v311
    %v366 = vpack.c.b16 %v316, %v314
    %v367 = vpack.c.b16 %v317, %v315
    %v368 = vpack.c.b16 %v320, %v318
    %v369 = vpack.c.b16 %v321, %v319
    %v370 = vpack.c.b16 %v324, %v322
    %v371 = vpack.c.b16 %v325, %v323
    %v372 = vpack.c.b16 %v328, %v326
    %v373 = vpack.c.b16 %v329, %v327
    %v374 = vpack.c.b16 %v332, %v330
    %v375 = vpack.c.b16 %v333, %v331
    %v376 = vpack.c.b16 %v336, %v334
    %v377 = vpack.c.b16 %v337, %v335
    %v378 = vpack.c.b16 %v340, %v338
    %v379 = vpack.c.b16 %v341, %v339
    %v380 = vpack.c.b16 %v344, %v342
    %v381 = vpack.c.b16 %v345, %v343
    %v382 = vpack.c.b16 %v348, %v346
    %v383 = vpack.c.b16 %v349, %v347
    %v384 = vpack.c.b16 %v352, %v350
    %v385 = vpack.c.b16 %v353, %v351
    %418 = vmatprep.subr.bf16.mxu0 %v369
    %419 = vmatpush1.bf16.msra.mxu0 %v368
    %420 = vmatprep.subr.bf16.mxu0 %v367
    %421 = vmatpush1.bf16.msra.mxu0 %v366
    %422 = vmatprep.subr.bf16.mxu0 %v365
    %423 = vmatpush1.bf16.msra.mxu0 %v364
    %424 = vmatprep.subr.bf16.mxu0 %v363
    %425 = vmatpush1.bf16.msra.mxu0 %v362
    %426 = vmatprep.subr.bf16.mxu0 %v361
    %427 = vmatpush1.bf16.msra.mxu0 %v360
    %428 = vmatprep.subr.bf16.mxu0 %v359
    %429 = vmatpush1.bf16.msra.mxu0 %v358
    %430 = vmatprep.subr.bf16.mxu0 %v357
    %431 = vmatpush1.bf16.msra.mxu0 %v356
    %432 = vmatprep.subr.bf16.mxu0 %v355
    %433 = vmatpush1.bf16.msra.mxu0 %v354
    %434 = vmatprep.subr.bf16.mxu0 %v385
    %435 = vmatpush2.bf16.msra.mxu0 %v384
    %436 = vmatprep.subr.bf16.mxu0 %v383
    %437 = vmatpush2.bf16.msra.mxu0 %v382
    %438 = vmatprep.subr.bf16.mxu0 %v381
    %439 = vmatpush2.bf16.msra.mxu0 %v380
    %440 = vmatprep.subr.bf16.mxu0 %v379
    %441 = vmatpush2.bf16.msra.mxu0 %v378
    %442 = vmatprep.subr.bf16.mxu0 %v377
    %443 = vmatpush2.bf16.msra.mxu0 %v376
    %444 = vmatprep.subr.bf16.mxu0 %v375
    %445 = vmatpush2.bf16.msra.mxu0 %v374
    %446 = vmatprep.subr.bf16.mxu0 %v373
    %447 = vmatpush2.bf16.msra.mxu0 %v372
    %448 = vmatprep.subr.bf16.mxu0 %v371
    %449 = vmatpush2.bf16.msra.mxu0 %v370
    %450 = vmatprep.mubr.bf16.mxu0 %v213
    %451 = vmatmul.mubr.bf16.gmra.mxu0 %v212
    %v452 = vpop.f32.mrf.mxu0
    %v453 = vadd.f32 %v251, %v452
    %v454 = vpop.f32.mrf.mxu0
    %v455 = vadd.f32 %v255, %v454
    %v456 = vpop.f32.mrf.mxu0
    %v457 = vadd.f32 %v251, %v456
    %v458 = vpop.f32.mrf.mxu0
    %v459 = vadd.f32 %v255, %v458
    %460 = vdwg.mxu0
    %v461 = vmax.f32 %v453, 0.0
    %v462 = vmax.f32 %v455, 0.0
    %v463 = vmax.f32 %v457, 0.0
    %v464 = vmax.f32 %v459, 0.0
    %v465 = vpack.c.bf16 %v463, %v461
    %v466 = vpack.c.bf16 %v464, %v462
    %v467 = vld [vmem:[#allocation8] sm:$0xff]
    %v468 = vld [vmem:[#allocation8 + $0x8] sm:$0xff]
    %v469 = vld [vmem:[#allocation8 + $0x10] sm:$0xff]
    %v470 = vld [vmem:[#allocation8 + $0x18] sm:$0xff]
    %v471 = vld [vmem:[#allocation8 + $0x20] sm:$0xff]
    %v472 = vld [vmem:[#allocation8 + $0x28] sm:$0xff]
    %v473 = vld [vmem:[#allocation8 + $0x30] sm:$0xff]
    %v474 = vld [vmem:[#allocation8 + $0x38] sm:$0xff]
    %v475 = vld [vmem:[#allocation8 + $0x40] sm:$0xff]
    %v476 = vld [vmem:[#allocation8 + $0x48] sm:$0xff]
    %v477 = vld [vmem:[#allocation8 + $0x50] sm:$0xff]
    %v478 = vld [vmem:[#allocation8 + $0x58] sm:$0xff]
    %v479 = vld [vmem:[#allocation8 + $0x60] sm:$0xff]
    %v480 = vld [vmem:[#allocation8 + $0x68] sm:$0xff]
    %v481 = vld [vmem:[#allocation8 + $0x70] sm:$0xff]
    %v482 = vld [vmem:[#allocation8 + $0x78] sm:$0xff]
    %v483 = vld [vmem:[#allocation8 + $0x80] sm:$0xff]
    %v484 = vld [vmem:[#allocation8 + $0x88] sm:$0xff]
    %v485 = vld [vmem:[#allocation8 + $0x90] sm:$0xff]
    %v486 = vld [vmem:[#allocation8 + $0x98] sm:$0xff]
    %v487 = vld [vmem:[#allocation8 + $0xa0] sm:$0xff]
    %v488 = vld [vmem:[#allocation8 + $0xa8] sm:$0xff]
    %v489 = vld [vmem:[#allocation8 + $0xb0] sm:$0xff]
    %v490 = vld [vmem:[#allocation8 + $0xb8] sm:$0xff]
    %v491 = vld [vmem:[#allocation8 + $0xc0] sm:$0xff]
    %v492 = vld [vmem:[#allocation8 + $0xc8] sm:$0xff]
    %v493 = vld [vmem:[#allocation8 + $0xd0] sm:$0xff]
    %v494 = vld [vmem:[#allocation8 + $0xd8] sm:$0xff]
    %v495 = vld [vmem:[#allocation8 + $0xe0] sm:$0xff]
    %v496 = vld [vmem:[#allocation8 + $0xe8] sm:$0xff]
    %v497 = vld [vmem:[#allocation8 + $0xf0] sm:$0xff]
    %v498 = vld [vmem:[#allocation8 + $0xf8] sm:$0xff]
    %v499 = vld [vmem:[%s6] sm:$0x3]
    %v501 = vlaneseq
    %v502 = vshrl.u32 %v501, 7
    %v503 = vsub.s32 0, %v502
    %v504 = vrot.slane %v499, %v503
    %v505 = vlaneseq
    %v506 = vshrl.u32 %v505, 7
    %v507 = vsub.s32 1, %v506
    %v508 = vrot.slane %v499, %v507
    %v543 = vunpack.c.l.b16 %v467
    %v544 = vunpack.c.h.b16 %v467
    %v545 = vunpack.c.l.b16 %v468
    %v546 = vunpack.c.h.b16 %v468
    %v547 = vunpack.c.l.b16 %v469
    %v548 = vunpack.c.h.b16 %v469
    %v549 = vunpack.c.l.b16 %v470
    %v550 = vunpack.c.h.b16 %v470
    %v551 = vunpack.c.l.b16 %v471
    %v552 = vunpack.c.h.b16 %v471
    %v553 = vunpack.c.l.b16 %v472
    %v554 = vunpack.c.h.b16 %v472
    %v555 = vunpack.c.l.b16 %v473
    %v556 = vunpack.c.h.b16 %v473
    %v557 = vunpack.c.l.b16 %v474
    %v558 = vunpack.c.h.b16 %v474
    %v559 = vunpack.c.l.b16 %v475
    %v560 = vunpack.c.h.b16 %v475
    %v561 = vunpack.c.l.b16 %v476
    %v562 = vunpack.c.h.b16 %v476
    %v563 = vunpack.c.l.b16 %v477
    %v564 = vunpack.c.h.b16 %v477
    %v565 = vunpack.c.l.b16 %v478
    %v566 = vunpack.c.h.b16 %v478
    %v567 = vunpack.c.l.b16 %v479
    %v568 = vunpack.c.h.b16 %v479
    %v569 = vunpack.c.l.b16 %v480
    %v570 = vunpack.c.h.b16 %v480
    %v571 = vunpack.c.l.b16 %v481
    %v572 = vunpack.c.h.b16 %v481
    %v573 = vunpack.c.l.b16 %v482
    %v574 = vunpack.c.h.b16 %v482
    %v575 = vunpack.c.l.b16 %v483
    %v576 = vunpack.c.h.b16 %v483
    %v577 = vunpack.c.l.b16 %v484
    %v578 = vunpack.c.h.b16 %v484
    %v579 = vunpack.c.l.b16 %v485
    %v580 = vunpack.c.h.b16 %v485
    %v581 = vunpack.c.l.b16 %v486
    %v582 = vunpack.c.h.b16 %v486
    %v583 = vunpack.c.l.b16 %v487
    %v584 = vunpack.c.h.b16 %v487
    %v585 = vunpack.c.l.b16 %v488
    %v586 = vunpack.c.h.b16 %v488
    %v587 = vunpack.c.l.b16 %v489
    %v588 = vunpack.c.h.b16 %v489
    %v589 = vunpack.c.l.b16 %v490
    %v590 = vunpack.c.h.b16 %v490
    %v591 = vunpack.c.l.b16 %v491
    %v592 = vunpack.c.h.b16 %v491
    %v593 = vunpack.c.l.b16 %v492
    %v594 = vunpack.c.h.b16 %v492
    %v595 = vunpack.c.l.b16 %v493
    %v596 = vunpack.c.h.b16 %v493
    %v597 = vunpack.c.l.b16 %v494
    %v598 = vunpack.c.h.b16 %v494
    %v599 = vunpack.c.l.b16 %v495
    %v600 = vunpack.c.h.b16 %v495
    %v601 = vunpack.c.l.b16 %v496
    %v602 = vunpack.c.h.b16 %v496
    %v603 = vunpack.c.l.b16 %v497
    %v604 = vunpack.c.h.b16 %v497
    %v605 = vunpack.c.l.b16 %v498
    %v606 = vunpack.c.h.b16 %v498
    %v607 = vpack.c.b16 %v545, %v543
    %v608 = vpack.c.b16 %v546, %v544
    %v609 = vpack.c.b16 %v549, %v547
    %v610 = vpack.c.b16 %v550, %v548
    %v611 = vpack.c.b16 %v553, %v551
    %v612 = vpack.c.b16 %v554, %v552
    %v613 = vpack.c.b16 %v557, %v555
    %v614 = vpack.c.b16 %v558, %v556
    %v615 = vpack.c.b16 %v561, %v559
    %v616 = vpack.c.b16 %v562, %v560
    %v617 = vpack.c.b16 %v565, %v563
    %v618 = vpack.c.b16 %v566, %v564
    %v619 = vpack.c.b16 %v569, %v567
    %v620 = vpack.c.b16 %v570, %v568
    %v621 = vpack.c.b16 %v573, %v571
    %v622 = vpack.c.b16 %v574, %v572
    %v623 = vpack.c.b16 %v577, %v575
    %v624 = vpack.c.b16 %v578, %v576
    %v625 = vpack.c.b16 %v581, %v579
    %v626 = vpack.c.b16 %v582, %v580
    %v627 = vpack.c.b16 %v585, %v583
    %v628 = vpack.c.b16 %v586, %v584
    %v629 = vpack.c.b16 %v589, %v587
    %v630 = vpack.c.b16 %v590, %v588
    %v631 = vpack.c.b16 %v593, %v591
    %v632 = vpack.c.b16 %v594, %v592
    %v633 = vpack.c.b16 %v597, %v595
    %v634 = vpack.c.b16 %v598, %v596
    %v635 = vpack.c.b16 %v601, %v599
    %v636 = vpack.c.b16 %v602, %v600
    %v637 = vpack.c.b16 %v605, %v603
    %v638 = vpack.c.b16 %v606, %v604
    %671 = vmatprep.subr.bf16.mxu0 %v622
    %672 = vmatpush1.bf16.msra.mxu0 %v621
    %673 = vmatprep.subr.bf16.mxu0 %v620
    %674 = vmatpush1.bf16.msra.mxu0 %v619
    %675 = vmatprep.subr.bf16.mxu0 %v618
    %676 = vmatpush1.bf16.msra.mxu0 %v617
    %677 = vmatprep.subr.bf16.mxu0 %v616
    %678 = vmatpush1.bf16.msra.mxu0 %v615
    %679 = vmatprep.subr.bf16.mxu0 %v614
    %680 = vmatpush1.bf16.msra.mxu0 %v613
    %681 = vmatprep.subr.bf16.mxu0 %v612
    %682 = vmatpush1.bf16.msra.mxu0 %v611
    %683 = vmatprep.subr.bf16.mxu0 %v610
    %684 = vmatpush1.bf16.msra.mxu0 %v609
    %685 = vmatprep.subr.bf16.mxu0 %v608
    %686 = vmatpush1.bf16.msra.mxu0 %v607
    %687 = vmatprep.subr.bf16.mxu0 %v638
    %688 = vmatpush2.bf16.msra.mxu0 %v637
    %689 = vmatprep.subr.bf16.mxu0 %v636
    %690 = vmatpush2.bf16.msra.mxu0 %v635
    %691 = vmatprep.subr.bf16.mxu0 %v634
    %692 = vmatpush2.bf16.msra.mxu0 %v633
    %693 = vmatprep.subr.bf16.mxu0 %v632
    %694 = vmatpush2.bf16.msra.mxu0 %v631
    %695 = vmatprep.subr.bf16.mxu0 %v630
    %696 = vmatpush2.bf16.msra.mxu0 %v629
    %697 = vmatprep.subr.bf16.mxu0 %v628
    %698 = vmatpush2.bf16.msra.mxu0 %v627
    %699 = vmatprep.subr.bf16.mxu0 %v626
    %700 = vmatpush2.bf16.msra.mxu0 %v625
    %701 = vmatprep.subr.bf16.mxu0 %v624
    %702 = vmatpush2.bf16.msra.mxu0 %v623
    %703 = vmatprep.mubr.bf16.mxu0 %v466
    %704 = vmatmul.mubr.bf16.gmra.mxu0 %v465
    %v705 = vpop.f32.mrf.mxu0
    %v706 = vadd.f32 %v504, %v705
    %v707 = vpop.f32.mrf.mxu0
    %v708 = vadd.f32 %v508, %v707
    %v709 = vpop.f32.mrf.mxu0
    %v710 = vadd.f32 %v504, %v709
    %v711 = vpop.f32.mrf.mxu0
    %v712 = vadd.f32 %v508, %v711
    %713 = vdwg.mxu0
    %v714 = vmax.f32 %v706, 0.0
    %v715 = vmax.f32 %v708, 0.0
    %v716 = vmax.f32 %v710, 0.0
    %v717 = vmax.f32 %v712, 0.0
    %v718 = vpack.c.bf16 %v716, %v714
    %v719 = vpack.c.bf16 %v717, %v715
    %v720 = vld [vmem:[#allocation10] sm:$0xf]
    %v721 = vld [vmem:[#allocation10 + $0x4] sm:$0xf]
    %v722 = vld [vmem:[#allocation10 + $0x8] sm:$0xf]
    %v723 = vld [vmem:[#allocation10 + $0xc] sm:$0xf]
    %v724 = vld [vmem:[#allocation10 + $0x10] sm:$0xf]
    %v725 = vld [vmem:[#allocation10 + $0x14] sm:$0xf]
    %v726 = vld [vmem:[#allocation10 + $0x18] sm:$0xf]
    %v727 = vld [vmem:[#allocation10 + $0x1c] sm:$0xf]
    %v728 = vld [vmem:[#allocation10 + $0x20] sm:$0xf]
    %v729 = vld [vmem:[#allocation10 + $0x24] sm:$0xf]
    %v730 = vld [vmem:[#allocation10 + $0x28] sm:$0xf]
    %v731 = vld [vmem:[#allocation10 + $0x2c] sm:$0xf]
    %v732 = vld [vmem:[#allocation10 + $0x30] sm:$0xf]
    %v733 = vld [vmem:[#allocation10 + $0x34] sm:$0xf]
    %v734 = vld [vmem:[#allocation10 + $0x38] sm:$0xf]
    %v735 = vld [vmem:[#allocation10 + $0x3c] sm:$0xf]
    %v736 = vld [vmem:[#allocation10 + $0x40] sm:$0xf]
    %v737 = vld [vmem:[#allocation10 + $0x44] sm:$0xf]
    %v738 = vld [vmem:[#allocation10 + $0x48] sm:$0xf]
    %v739 = vld [vmem:[#allocation10 + $0x4c] sm:$0xf]
    %v740 = vld [vmem:[#allocation10 + $0x50] sm:$0xf]
    %v741 = vld [vmem:[#allocation10 + $0x54] sm:$0xf]
    %v742 = vld [vmem:[#allocation10 + $0x58] sm:$0xf]
    %v743 = vld [vmem:[#allocation10 + $0x5c] sm:$0xf]
    %v744 = vld [vmem:[#allocation10 + $0x60] sm:$0xf]
    %v745 = vld [vmem:[#allocation10 + $0x64] sm:$0xf]
    %v746 = vld [vmem:[#allocation10 + $0x68] sm:$0xf]
    %v747 = vld [vmem:[#allocation10 + $0x6c] sm:$0xf]
    %v748 = vld [vmem:[#allocation10 + $0x70] sm:$0xf]
    %v749 = vld [vmem:[#allocation10 + $0x74] sm:$0xf]
    %v750 = vld [vmem:[#allocation10 + $0x78] sm:$0xf]
    %v751 = vld [vmem:[#allocation10 + $0x7c] sm:$0xf]
    %v752 = vld [vmem:[%s8] sm:$0x1]
    %v754 = vlaneseq
    %v755 = vshrl.u32 %v754, 7
    %v756 = vsub.s32 0, %v755
    %v757 = vrot.slane %v752, %v756
    %v791 = vunpack.c.l.b16 %v720
    %v792 = vunpack.c.l.b16 %v721
    %v793 = vunpack.c.l.b16 %v722
    %v794 = vunpack.c.l.b16 %v723
    %v795 = vunpack.c.l.b16 %v724
    %v796 = vunpack.c.l.b16 %v725
    %v797 = vunpack.c.l.b16 %v726
    %v798 = vunpack.c.l.b16 %v727
    %v799 = vunpack.c.l.b16 %v728
    %v800 = vunpack.c.l.b16 %v729
    %v801 = vunpack.c.l.b16 %v730
    %v802 = vunpack.c.l.b16 %v731
    %v803 = vunpack.c.l.b16 %v732
    %v804 = vunpack.c.l.b16 %v733
    %v805 = vunpack.c.l.b16 %v734
    %v806 = vunpack.c.l.b16 %v735
    %v807 = vunpack.c.l.b16 %v736
    %v808 = vunpack.c.l.b16 %v737
    %v809 = vunpack.c.l.b16 %v738
    %v810 = vunpack.c.l.b16 %v739
    %v811 = vunpack.c.l.b16 %v740
    %v812 = vunpack.c.l.b16 %v741
    %v813 = vunpack.c.l.b16 %v742
    %v814 = vunpack.c.l.b16 %v743
    %v815 = vunpack.c.l.b16 %v744
    %v816 = vunpack.c.l.b16 %v745
    %v817 = vunpack.c.l.b16 %v746
    %v818 = vunpack.c.l.b16 %v747
    %v819 = vunpack.c.l.b16 %v748
    %v820 = vunpack.c.l.b16 %v749
    %v821 = vunpack.c.l.b16 %v750
    %v822 = vunpack.c.l.b16 %v751
    %v823 = vpack.c.b16 %v792, %v791
    %v824 = vpack.c.b16 %v794, %v793
    %v825 = vpack.c.b16 %v796, %v795
    %v826 = vpack.c.b16 %v798, %v797
    %v827 = vpack.c.b16 %v800, %v799
    %v828 = vpack.c.b16 %v802, %v801
    %v829 = vpack.c.b16 %v804, %v803
    %v830 = vpack.c.b16 %v806, %v805
    %v831 = vpack.c.b16 %v808, %v807
    %v832 = vpack.c.b16 %v810, %v809
    %v833 = vpack.c.b16 %v812, %v811
    %v834 = vpack.c.b16 %v814, %v813
    %v835 = vpack.c.b16 %v816, %v815
    %v836 = vpack.c.b16 %v818, %v817
    %v837 = vpack.c.b16 %v820, %v819
    %v838 = vpack.c.b16 %v822, %v821
    %855 = vmatprep.subr.bf16.mxu0 0
    %856 = vmatpush1.bf16.msra.mxu0 %v830
    %857 = vmatprep.subr.bf16.mxu0 0
    %858 = vmatpush1.bf16.msra.mxu0 %v829
    %859 = vmatprep.subr.bf16.mxu0 0
    %860 = vmatpush1.bf16.msra.mxu0 %v828
    %861 = vmatprep.subr.bf16.mxu0 0
    %862 = vmatpush1.bf16.msra.mxu0 %v827
    %863 = vmatprep.subr.bf16.mxu0 0
    %864 = vmatpush1.bf16.msra.mxu0 %v826
    %865 = vmatprep.subr.bf16.mxu0 0
    %866 = vmatpush1.bf16.msra.mxu0 %v825
    %867 = vmatprep.subr.bf16.mxu0 0
    %868 = vmatpush1.bf16.msra.mxu0 %v824
    %869 = vmatprep.subr.bf16.mxu0 0
    %870 = vmatpush1.bf16.msra.mxu0 %v823
    %871 = vmatprep.subr.bf16.mxu0 0
    %872 = vmatpush2.bf16.msra.mxu0 %v838
    %873 = vmatprep.subr.bf16.mxu0 0
    %874 = vmatpush2.bf16.msra.mxu0 %v837
    %875 = vmatprep.subr.bf16.mxu0 0
    %876 = vmatpush2.bf16.msra.mxu0 %v836
    %877 = vmatprep.subr.bf16.mxu0 0
    %878 = vmatpush2.bf16.msra.mxu0 %v835
    %879 = vmatprep.subr.bf16.mxu0 0
    %880 = vmatpush2.bf16.msra.mxu0 %v834
    %881 = vmatprep.subr.bf16.mxu0 0
    %882 = vmatpush2.bf16.msra.mxu0 %v833
    %883 = vmatprep.subr.bf16.mxu0 0
    %884 = vmatpush2.bf16.msra.mxu0 %v832
    %885 = vmatprep.subr.bf16.mxu0 0
    %886 = vmatpush2.bf16.msra.mxu0 %v831
    %887 = vmatprep.mubr.bf16.mxu0 %v719
    %888 = vmatmul.mubr.bf16.gmra.mxu0 %v718
    %v889 = vpop.f32.mrf.mxu0
    %v890 = vadd.f32 %v757, %v889
    %v891 = vpop.f32.mrf.mxu0
    %v892 = vpop.f32.mrf.mxu0
    %v893 = vadd.f32 %v757, %v892
    %v894 = vpop.f32.mrf.mxu0
    %895 = vdwg.mxu0
    %896 = vst [vmem:[#allocation11] sm:$0xff] %v890
    %897 = vst [vmem:[#allocation11 + $0x8] sm:$0xff] %v893
    // Predicated region
    $region58: #{tpu_custom_call.1} parent=1 // pred_check
      _
    $region59: #{tpu_custom_call.1} parent=1 // pred_check_branch
      %899 = sbr.rel (0) target = $region61
    $region60: #{tpu_custom_call.1} parent=1 // pred_region
      %s901 = ssub.s32 256, 256
      %902 = vsyncadd [#allocation4], %s901
      %s903 = sshll.u32 [#allocation11], 4
      %s904 = int_to_ptr.vmem [resolvable:$true] %s903
      %909 = dma.vmem_to_hbm [thread:$0]  %s904, 256, %s9, [#allocation4], 128, 128, 8
    $region61: #{tpu_custom_call.1} parent=1 // pred_fallthru
      _
    // Predicated region
    $region62: #{tpu_custom_call.1} parent=1 // pred_check
      _
    $region63: #{tpu_custom_call.1} parent=1 // pred_check_branch
      %911 = sbr.rel (0) target = $region65
    $region64: #{tpu_custom_call.1} parent=1 // pred_region
      %912 = dma.done [#allocation4], 256
    $region65: #{tpu_custom_call.1} parent=1 // pred_fallthru
      _
    %913 = vsyncpa [#allocation3], 1
    %914 = vsyncpa [#allocation6], 1
    %915 = vsyncpa [#allocation9], 1
    %916 = vsyncpa [#allocation4], 1

</llo_original>
